<compile_context>
chip_gen: v6e
topology: v6e:2x2x1
jax: 0.10.0
libtpu: 0.0.40
codegen_flags: <defaults>
</compile_context>

<pallas_src>
import jax
import jax.numpy as jnp
from jax.experimental import pallas as pl
from jax.experimental.pallas import tpu as pltpu


def _round_up(a, b):
    return (a + b - 1) // b * b


def _gelu_tanh(x):
    # GELU, tanh approximation (tanh goes to the EUP on TPU).
    c = 0.7978845608028654  # sqrt(2/pi)
    return 0.5 * x * (1.0 + jnp.tanh(c * (x + 0.044715 * x * x * x)))


# ----- Pallas kernel -----------------------------------------------------------------
def dual_path_mlp_kernel(off_ref, x_ref, wfc_ref, bfc_ref, w1_ref, w2_ref, bdn_ref,
                         o_ref, acc_ref):
    # off_ref : SMEM (2,)        [x_offset, y_offset]
    # x_ref   : (TM, D)          input row tile (already in matmul dtype)
    # wfc_ref : (D, TE)          c_fc weight chunk, pre-transposed
    # bfc_ref : (1, TE)          c_fc bias chunk
    # w1_ref  : (TE, D_out)      c_proj1 weight chunk, pre-transposed
    # w2_ref  : (TE, D_out)      c_proj2 weight chunk, pre-transposed
    # bdn_ref : (1, D_out)       b_proj1 + b_proj2 (folded once in the wrapper)
    # o_ref   : (TM, D_out)      output row tile
    # acc_ref : (TM, D_out) f32  VMEM scratch accumulator (resident across the k axis)
    k = pl.program_id(1)

    @pl.when(k == 0)
    def _init():
        acc_ref[...] = jnp.zeros_like(acc_ref)

    x_off = off_ref[0]
    y_off = off_ref[1]
    mm_dtype = wfc_ref.dtype

    # up-projection chunk (MXU), f32 accumulation
    h = jnp.dot(x_ref[...], wfc_ref[...], preferred_element_type=jnp.float32)
    h = h + bfc_ref[...]

    # dual activation paths (VPU + EUP tanh), all in f32
    a1 = _gelu_tanh(h - x_off) - y_off
    hp = h + x_off
    a2 = hp - _gelu_tanh(hp) - y_off          # == -gelu(-(h + x_off)) - y_off

    # both down-projection chunks accumulate into the resident f32 accumulator
    acc_ref[...] += jnp.dot(a1.astype(mm_dtype), w1_ref[...],
                            preferred_element_type=jnp.float32)
    acc_ref[...] += jnp.dot(a2.astype(mm_dtype), w2_ref[...],
                            preferred_element_type=jnp.float32)

    @pl.when(k == pl.num_programs(1) - 1)
    def _finalize():
        o_ref[...] = (acc_ref[...] + bdn_ref[...]).astype(o_ref.dtype)


# ----- parameter layout prep (do once, outside the per-step forward) -----------------
def prepare_params(params, matmul_dtype=jnp.bfloat16, tile_e=None):
    """Transpose weights so every in-kernel matmul is (TM, K) @ (K, N), pad the hidden
    dim E to a multiple of the E-tile (zero-padded W rows/cols contribute nothing), fold
    the two down-proj biases, and pack the scalar offsets for SMEM.
    matmul_dtype defaults to bf16 (MXU-native on v5e/v6e/v7x); f32 accumulation is kept
    inside the kernel. Use matmul_dtype=jnp.float32 for a tight numerical check."""
    w_fc = jnp.asarray(params["w_fc"])         # (E, D)      torch (out, in) layout
    w1 = jnp.asarray(params["w_proj1"])        # (D_out, E)
    w2 = jnp.asarray(params["w_proj2"])        # (D_out, E)
    b_fc = jnp.asarray(params["b_fc"], jnp.float32)
    E, _ = w_fc.shape

    if tile_e is None:
        tile_e = 512                                    # weight-chunk streaming granule
    tile_e = min(_round_up(tile_e, 128), _round_up(E, 128))   # lane-aligned, <= padded E
    e_pad = _round_up(E, tile_e)

    wfc_t = w_fc.T.astype(matmul_dtype)        # (D, E)
    w1_t = w1.T.astype(matmul_dtype)           # (E, D_out)
    w2_t = w2.T.astype(matmul_dtype)           # (E, D_out)
    if e_pad != E:
        wfc_t = jnp.pad(wfc_t, ((0, 0), (0, e_pad - E)))
        w1_t = jnp.pad(w1_t, ((0, e_pad - E), (0, 0)))
        w2_t = jnp.pad(w2_t, ((0, e_pad - E), (0, 0)))
        b_fc = jnp.pad(b_fc, (0, e_pad - E))

    return dict(
        wfc_t=wfc_t,                                            # (D, E_pad)
        w1_t=w1_t,                                              # (E_pad, D_out)
        w2_t=w2_t,                                              # (E_pad, D_out)
        bfc=b_fc.reshape(1, -1),                                # (1, E_pad) f32
        bdn=(jnp.asarray(params["b_proj1"]) + jnp.asarray(params["b_proj2"]))
            .reshape(1, -1).astype(jnp.float32),                # (1, D_out) f32
        off=jnp.array([params["x_offset"], params["y_offset"]], jnp.float32),  # (2,)
        tile_e=int(tile_e),
    )


# ----- wrapper -----------------------------------------------------------------------
def dual_path_mlp_forward(x, prep, *, tile_rows=None):
    """x: (B, T, n_embd). prep: output of prepare_params. Returns (y, None)."""
    B, T, D = x.shape
    e_pad = prep["wfc_t"].shape[1]
    te = prep["tile_e"]
    D_out = prep["w1_t"].shape[1]
    mm_dtype = prep["wfc_t"].dtype
    N = B * T

    # --- generation-aware defaults (VMEM capacity is the proxy: 64 MiB/TC => v7x-like) ---
    try:
        vmem_cap = int(getattr(pltpu.get_tpu_info(), "vmem_capacity_bytes",
                               128 * 1024 * 1024))
    except Exception:  # pragma: no cover - conservative fallback
        vmem_cap = 128 * 1024 * 1024
    small_vmem = vmem_cap <= 80 * 1024 * 1024

    if tile_rows is None:
        tile_rows = 256 if small_vmem else 512

    # --- balanced ragged-N row tiles --------------------------------------------------
    n_tiles = max(1, -(-N // tile_rows))
    if small_vmem and n_tiles == 1 and N > 8:
        n_tiles = 2                      # keep both v7x TensorCores busy on small N
    tm = _round_up(-(-N // n_tiles), 8)
    n_pad = n_tiles * tm

    x2 = x.reshape(N, D).astype(mm_dtype)     # cast once here (halves input DMA for bf16)
    if n_pad != N:
        x2 = jnp.pad(x2, ((0, n_pad - N), (0, 0)))

    k_tiles = e_pad // te

    # --- VMEM budget: chunked operands are double-buffered by the default pipeliner ----
    w_item = mm_dtype.itemsize
    per_step_bytes = (
        2 * tm * D * w_item                          # x row tile
        + 2 * (D * te + 2 * te * D_out) * w_item     # Wfc / W1 / W2 chunks
        + 2 * (te + D_out) * 4                       # bias chunks
        + 2 * tm * D_out * x.dtype.itemsize          # output tile
        + tm * D_out * 4                             # f32 accumulator scratch
        + 4 * tm * te * 4                            # h / a1 / a2 intermediates + slack
    )
    vmem_limit = int(min(int(0.85 * vmem_cap),
                         max(32 * 1024 * 1024, per_step_bytes + (4 << 20))))

    cost = pl.CostEstimate(
        flops=int(2 * n_pad * D * e_pad + 2 * 2 * n_pad * e_pad * D_out),
        transcendentals=int(2 * n_pad * e_pad),
        bytes_accessed=int(n_pad * (D * w_item + D_out * x.dtype.itemsize)
                           + n_tiles * (D * e_pad + 2 * e_pad * D_out) * w_item),
    )

    out = pl.pallas_call(
        dual_path_mlp_kernel,
        out_shape=jax.ShapeDtypeStruct((n_pad, D_out), x.dtype),
        grid_spec=pltpu.PrefetchScalarGridSpec(
            num_scalar_prefetch=0,
            grid=(n_tiles, k_tiles),
            in_specs=[
                pl.BlockSpec(memory_space=pltpu.MemorySpace.SMEM),      # offsets (2,)
                pl.BlockSpec((tm, D), lambda i, k: (i, 0)),             # x row tile
                pl.BlockSpec((D, te), lambda i, k: (0, k)),             # Wfc^T chunk
                pl.BlockSpec((1, te), lambda i, k: (0, k)),             # b_fc chunk
                pl.BlockSpec((te, D_out), lambda i, k: (k, 0)),         # W1^T chunk
                pl.BlockSpec((te, D_out), lambda i, k: (k, 0)),         # W2^T chunk
                pl.BlockSpec((1, D_out), lambda i, k: (0, 0)),          # b1 + b2
            ],
            out_specs=pl.BlockSpec((tm, D_out), lambda i, k: (i, 0)),
            scratch_shapes=[pltpu.VMEM((tm, D_out), jnp.float32)],
        ),
        compiler_params=pltpu.CompilerParams(
            dimension_semantics=("parallel", "arbitrary"),
            vmem_limit_bytes=vmem_limit,
        ),
        cost_estimate=cost,
    )(prep["off"], x2, prep["wfc_t"], prep["bfc"], prep["w1_t"], prep["w2_t"], prep["bdn"])

    y = out[:N].reshape(B, T, D_out)
    # dropout with p = 0.0 -> identity (eval semantics)
    return y, None


# ----- pure-JAX reference (for correctness check) ------------------------------------
def dual_path_mlp_ref(x, params):
    hp = jax.lax.Precision.HIGHEST
    B, T, D = x.shape
    x2 = x.reshape(-1, D)
    h = jnp.dot(x2, params["w_fc"].T, precision=hp) + params["b_fc"]
    a1 = _gelu_tanh(h - params["x_offset"]) - params["y_offset"]
    a2 = -_gelu_tanh(-(h + params["x_offset"])) - params["y_offset"]
    y = (jnp.dot(a1, params["w_proj1"].T, precision=hp) + params["b_proj1"]
         + jnp.dot(a2, params["w_proj2"].T, precision=hp) + params["b_proj2"])
    return y.reshape(B, T, -1), None


if __name__ == "__main__":
    # Small deterministic problem: batch=2, seq=8, n_embd=128, mlp_size = 4 * n_embd.
    B, T, D = 2, 8, 128
    E = 4 * D

    key = jax.random.PRNGKey(0)
    kx, k1, k2, k3, k4, k5, k6 = jax.random.split(key, 7)

    x = jax.random.normal(kx, (B, T, D), dtype=jnp.float32)

    params = dict(
        w_fc=0.05 * jax.random.normal(k1, (E, D), jnp.float32),      # torch (out, in) layout
        b_fc=0.02 * jax.random.normal(k2, (E,), jnp.float32),
        w_proj1=0.05 * jax.random.normal(k3, (D, E), jnp.float32),
        b_proj1=0.02 * jax.random.normal(k4, (D,), jnp.float32),
        w_proj2=0.05 * jax.random.normal(k5, (D, E), jnp.float32),
        b_proj2=0.02 * jax.random.normal(k6, (D,), jnp.float32),
        x_offset=0.1,    # config.mlp_x_offset
        y_offset=0.05,   # config.mlp_y_offset
    )

    y_ref, _ = dual_path_mlp_ref(x, params)

    # Production path: bf16 matmul operands, tile_e=256 so the E-reduction grid axis
    # (k_tiles=2) and the accumulator init/finalize path are actually exercised.
    prep_bf16 = prepare_params(params, tile_e=256)
    y, aux = dual_path_mlp_forward(x, prep_bf16)
    y = jax.block_until_ready(y)
    assert y.shape == (B, T, D)
    assert aux is None
    assert jnp.allclose(y, y_ref, atol=3e-2, rtol=3e-2), (
        "bf16 mismatch vs reference, max abs diff "
        f"{jnp.max(jnp.abs(y - y_ref))}")

    # Tight-tolerance check with f32 matmul operands (same kernel / tiling path).
    prep_f32 = prepare_params(params, matmul_dtype=jnp.float32, tile_e=256)
    y32, _ = dual_path_mlp_forward(x, prep_f32)
    y32 = jax.block_until_ready(y32)
    assert jnp.allclose(y32, y_ref, atol=1e-3, rtol=1e-3), (
        "f32 mismatch vs reference, max abs diff "
        f"{jnp.max(jnp.abs(y32 - y_ref))}")

    print("KERNEL_OK")
</pallas_src>

<mosaic_0001>
module attributes {stable_mosaic.version = 11 : i64} {
  func.func @dual_path_mlp_kernel(%arg0: i32, %arg1: i32, %arg2: memref<2xf32, #tpu.memory_space<smem>>, %arg3: memref<16x128xbf16, #tpu.memory_space<vmem>>, %arg4: memref<128x256xbf16, #tpu.memory_space<vmem>>, %arg5: memref<1x256xf32, #tpu.memory_space<vmem>>, %arg6: memref<256x128xbf16, #tpu.memory_space<vmem>>, %arg7: memref<256x128xbf16, #tpu.memory_space<vmem>>, %arg8: memref<1x128xf32, #tpu.memory_space<vmem>>, %arg9: memref<16x128xf32, #tpu.memory_space<vmem>>, %arg10: memref<16x128xf32, #tpu.memory_space<vmem>>) attributes {dimension_semantics = [#tpu.dimension_semantics<parallel>, #tpu.dimension_semantics<arbitrary>], iteration_bounds = array<i64: 1, 2>, scalar_prefetch = 0 : i64, scratch_operands = 1 : i64, tpu.core_type = #tpu.core_type<tc>, window_params = [{transform_indices = @transform_0, window_bounds = array<i64: 2>}, {transform_indices = @transform_1, window_bounds = array<i64: 16, 128>}, {transform_indices = @transform_2, window_bounds = array<i64: 128, 256>}, {transform_indices = @transform_3, window_bounds = array<i64: 1, 256>}, {transform_indices = @transform_4, window_bounds = array<i64: 256, 128>}, {transform_indices = @transform_5, window_bounds = array<i64: 256, 128>}, {pipeline_mode = #tpu.pipeline_mode<synchronous>, transform_indices = @transform_6, window_bounds = array<i64: 1, 128>}, {transform_indices = @transform_7, window_bounds = array<i64: 16, 128>}]} {
    %c0_i32 = arith.constant 0 : i32
    %0 = arith.cmpi eq, %arg1, %c0_i32 : i32
    %1 = arith.extui %0 : i1 to i32
    %c0_i32_0 = arith.constant 0 : i32
    %2 = arith.cmpi ne, %1, %c0_i32_0 : i32
    scf.if %2 {
      %cst_30 = arith.constant 0.000000e+00 : f32
      %61 = vector.broadcast %cst_30 : f32 to vector<16x128xf32>
      %c0_31 = arith.constant 0 : index
      %c0_32 = arith.constant 0 : index
      %62 = vector.load %arg10[%c0_31, %c0_32] : memref<16x128xf32, #tpu.memory_space<vmem>>, vector<16x128xf32>
      tpu.vector_store %arg10[%c0_31, %c0_32], %61 {strides = array<i32>} : memref<16x128xf32, #tpu.memory_space<vmem>>, vector<16x128xf32>,
    } else {
    }
    %c0 = arith.constant 0 : index
    %3 = memref.load %arg2[%c0] : memref<2xf32, #tpu.memory_space<smem>>
    %c1 = arith.constant 1 : index
    %4 = memref.load %arg2[%c1] : memref<2xf32, #tpu.memory_space<smem>>
    %c0_1 = arith.constant 0 : index
    %c0_2 = arith.constant 0 : index
    %5 = vector.load %arg3[%c0_1, %c0_2] : memref<16x128xbf16, #tpu.memory_space<vmem>>, vector<16x128xbf16>
    %c0_3 = arith.constant 0 : index
    %c0_4 = arith.constant 0 : index
    %6 = vector.load %arg4[%c0_3, %c0_4] : memref<128x256xbf16, #tpu.memory_space<vmem>>, vector<128x256xbf16>
    %cst = arith.constant dense<0.000000e+00> : vector<16x256xf32>
    %7 = tpu.matmul %5, %6, %cst {dimension_numbers = #tpu.dot_dimension_numbers<[1], [0], [0], [1], [0, 0, 1, 1], [], []>} : vector<16x128xbf16>, vector<128x256xbf16>, vector<16x256xf32> -> vector<16x256xf32>
    %c0_5 = arith.constant 0 : index
    %c0_6 = arith.constant 0 : index
    %8 = vector.load %arg5[%c0_5, %c0_6] : memref<1x256xf32, #tpu.memory_space<vmem>>, vector<1x256xf32>
    %9 = vector.broadcast %8 : vector<1x256xf32> to vector<16x256xf32>
    %10 = arith.addf %7, %9 : vector<16x256xf32>
    %11 = vector.broadcast %3 : f32 to vector<16x256xf32>
    %12 = arith.subf %10, %11 : vector<16x256xf32>
    %cst_7 = arith.constant 5.000000e-01 : f32
    %13 = vector.broadcast %cst_7 : f32 to vector<16x256xf32>
    %14 = arith.mulf %13, %12 : vector<16x256xf32>
    %cst_8 = arith.constant 4.471500e-02 : f32
    %15 = vector.broadcast %cst_8 : f32 to vector<16x256xf32>
    %16 = arith.mulf %15, %12 : vector<16x256xf32>
    %17 = arith.mulf %16, %12 : vector<16x256xf32>
    %18 = arith.mulf %17, %12 : vector<16x256xf32>
    %19 = arith.addf %12, %18 : vector<16x256xf32>
    %cst_9 = arith.constant 0.797884583 : f32
    %20 = vector.broadcast %cst_9 : f32 to vector<16x256xf32>
    %21 = arith.mulf %20, %19 : vector<16x256xf32>
    %22 = math.tanh %21 : vector<16x256xf32>
    %cst_10 = arith.constant 1.000000e+00 : f32
    %23 = vector.broadcast %cst_10 : f32 to vector<16x256xf32>
    %24 = arith.addf %23, %22 : vector<16x256xf32>
    %25 = arith.mulf %14, %24 : vector<16x256xf32>
    %26 = vector.broadcast %4 : f32 to vector<16x256xf32>
    %27 = arith.subf %25, %26 : vector<16x256xf32>
    %28 = vector.broadcast %3 : f32 to vector<16x256xf32>
    %29 = arith.addf %10, %28 : vector<16x256xf32>
    %cst_11 = arith.constant 5.000000e-01 : f32
    %30 = vector.broadcast %cst_11 : f32 to vector<16x256xf32>
    %31 = arith.mulf %30, %29 : vector<16x256xf32>
    %cst_12 = arith.constant 4.471500e-02 : f32
    %32 = vector.broadcast %cst_12 : f32 to vector<16x256xf32>
    %33 = arith.mulf %32, %29 : vector<16x256xf32>
    %34 = arith.mulf %33, %29 : vector<16x256xf32>
    %35 = arith.mulf %34, %29 : vector<16x256xf32>
    %36 = arith.addf %29, %35 : vector<16x256xf32>
    %cst_13 = arith.constant 0.797884583 : f32
    %37 = vector.broadcast %cst_13 : f32 to vector<16x256xf32>
    %38 = arith.mulf %37, %36 : vector<16x256xf32>
    %39 = math.tanh %38 : vector<16x256xf32>
    %cst_14 = arith.constant 1.000000e+00 : f32
    %40 = vector.broadcast %cst_14 : f32 to vector<16x256xf32>
    %41 = arith.addf %40, %39 : vector<16x256xf32>
    %42 = arith.mulf %31, %41 : vector<16x256xf32>
    %43 = arith.subf %29, %42 : vector<16x256xf32>
    %44 = vector.broadcast %4 : f32 to vector<16x256xf32>
    %45 = arith.subf %43, %44 : vector<16x256xf32>
    %c0_15 = arith.constant 0 : index
    %c0_16 = arith.constant 0 : index
    %46 = vector.load %arg10[%c0_15, %c0_16] : memref<16x128xf32, #tpu.memory_space<vmem>>, vector<16x128xf32>
    %47 = arith.truncf %27 : vector<16x256xf32> to vector<16x256xbf16>
    %c0_17 = arith.constant 0 : index
    %c0_18 = arith.constant 0 : index
    %48 = vector.load %arg6[%c0_17, %c0_18] : memref<256x128xbf16, #tpu.memory_space<vmem>>, vector<256x128xbf16>
    %cst_19 = arith.constant dense<0.000000e+00> : vector<16x128xf32>
    %49 = tpu.matmul %47, %48, %cst_19 {dimension_numbers = #tpu.dot_dimension_numbers<[1], [0], [0], [1], [0, 0, 1, 1], [], []>} : vector<16x256xbf16>, vector<256x128xbf16>, vector<16x128xf32> -> vector<16x128xf32>
    %50 = arith.addf %46, %49 : vector<16x128xf32>
    %c0_20 = arith.constant 0 : index
    %c0_21 = arith.constant 0 : index
    %51 = vector.load %arg10[%c0_20, %c0_21] : memref<16x128xf32, #tpu.memory_space<vmem>>, vector<16x128xf32>
    tpu.vector_store %arg10[%c0_20, %c0_21], %50 {strides = array<i32>} : memref<16x128xf32, #tpu.memory_space<vmem>>, vector<16x128xf32>,
    %c0_22 = arith.constant 0 : index
    %c0_23 = arith.constant 0 : index
    %52 = vector.load %arg10[%c0_22, %c0_23] : memref<16x128xf32, #tpu.memory_space<vmem>>, vector<16x128xf32>
    %53 = arith.truncf %45 : vector<16x256xf32> to vector<16x256xbf16>
    %c0_24 = arith.constant 0 : index
    %c0_25 = arith.constant 0 : index
    %54 = vector.load %arg7[%c0_24, %c0_25] : memref<256x128xbf16, #tpu.memory_space<vmem>>, vector<256x128xbf16>
    %cst_26 = arith.constant dense<0.000000e+00> : vector<16x128xf32>
    %55 = tpu.matmul %53, %54, %cst_26 {dimension_numbers = #tpu.dot_dimension_numbers<[1], [0], [0], [1], [0, 0, 1, 1], [], []>} : vector<16x256xbf16>, vector<256x128xbf16>, vector<16x128xf32> -> vector<16x128xf32>
    %56 = arith.addf %52, %55 : vector<16x128xf32>
    %c0_27 = arith.constant 0 : index
    %c0_28 = arith.constant 0 : index
    %57 = vector.load %arg10[%c0_27, %c0_28] : memref<16x128xf32, #tpu.memory_space<vmem>>, vector<16x128xf32>
    tpu.vector_store %arg10[%c0_27, %c0_28], %56 {strides = array<i32>} : memref<16x128xf32, #tpu.memory_space<vmem>>, vector<16x128xf32>,
    %c1_i32 = arith.constant 1 : i32
    %58 = arith.cmpi eq, %arg1, %c1_i32 : i32
    %59 = arith.extui %58 : i1 to i32
    %c0_i32_29 = arith.constant 0 : i32
    %60 = arith.cmpi ne, %59, %c0_i32_29 : i32
    scf.if %60 {
      %c0_30 = arith.constant 0 : index
      %c0_31 = arith.constant 0 : index
      %61 = vector.load %arg10[%c0_30, %c0_31] : memref<16x128xf32, #tpu.memory_space<vmem>>, vector<16x128xf32>
      %c0_32 = arith.constant 0 : index
      %c0_33 = arith.constant 0 : index
      %62 = vector.load %arg8[%c0_32, %c0_33] : memref<1x128xf32, #tpu.memory_space<vmem>>, vector<1x128xf32>
      %63 = vector.broadcast %62 : vector<1x128xf32> to vector<16x128xf32>
      %64 = arith.addf %61, %63 : vector<16x128xf32>
      %c0_34 = arith.constant 0 : index
      %c0_35 = arith.constant 0 : index
      %65 = vector.load %arg9[%c0_34, %c0_35] : memref<16x128xf32, #tpu.memory_space<vmem>>, vector<16x128xf32>
      tpu.vector_store %arg9[%c0_34, %c0_35], %64 {strides = array<i32>} : memref<16x128xf32, #tpu.memory_space<vmem>>, vector<16x128xf32>,
    } else {
    }
    return
  }
  func.func @transform_0(%arg0: i32, %arg1: i32) -> i32 {
    %c0_i32 = arith.constant 0 : i32
    %c0_i32_0 = arith.constant 0 : i32
    return %c0_i32 : i32
  }
  func.func @transform_1(%arg0: i32, %arg1: i32) -> (i32, i32) {
    %c0_i32 = arith.constant 0 : i32
    %c0_i32_0 = arith.constant 0 : i32
    return %arg0, %c0_i32 : i32, i32
  }
  func.func @transform_2(%arg0: i32, %arg1: i32) -> (i32, i32) {
    %c0_i32 = arith.constant 0 : i32
    %c0_i32_0 = arith.constant 0 : i32
    return %c0_i32, %arg1 : i32, i32
  }
  func.func @transform_3(%arg0: i32, %arg1: i32) -> (i32, i32) {
    %c0_i32 = arith.constant 0 : i32
    %c0_i32_0 = arith.constant 0 : i32
    return %c0_i32, %arg1 : i32, i32
  }
  func.func @transform_4(%arg0: i32, %arg1: i32) -> (i32, i32) {
    %c0_i32 = arith.constant 0 : i32
    %c0_i32_0 = arith.constant 0 : i32
    return %arg1, %c0_i32 : i32, i32
  }
  func.func @transform_5(%arg0: i32, %arg1: i32) -> (i32, i32) {
    %c0_i32 = arith.constant 0 : i32
    %c0_i32_0 = arith.constant 0 : i32
    return %arg1, %c0_i32 : i32, i32
  }
  func.func @transform_6(%arg0: i32, %arg1: i32) -> (i32, i32) {
    %c0_i32 = arith.constant 0 : i32
    %c0_i32_0 = arith.constant 0 : i32
    %c0_i32_1 = arith.constant 0 : i32
    return %c0_i32, %c0_i32_0 : i32, i32
  }
  func.func @transform_7(%arg0: i32, %arg1: i32) -> (i32, i32) {
    %c0_i32 = arith.constant 0 : i32
    %c0_i32_0 = arith.constant 0 : i32
    return %arg0, %c0_i32 : i32, i32
  }
}

</mosaic_0001>

<llo_original>
// kernel: tpu_custom_call.1
$region0: #{tpu_custom_call.1}
  #allocation0 [shape = 'u32[]', space=smem, size = 0x4, offset = 0x4, fixed_abs, tag = 'smem constant byte address 0x4 - core index']
  #allocation1 [shape = 'u32[144,128]{1,0:T(1,128)}', space=vmem, size = 0x12000, scoped, tag = 'internal scratch']
  #allocation2 [shape = 'f32[16,128]{1,0:T(8,128)}', space=vmem, size = 0x2000, scoped, tag = 'scratch operand']
  %s0 = inlined_call_operand.hbm [shape: f32[2], index: 0, kind: input, shape index: {}]
  %s1 = inlined_call_operand.hbm [shape: bf16[16,128], index: 1, kind: input, shape index: {}]
  %s2 = inlined_call_operand.hbm [shape: bf16[128,512], index: 2, kind: input, shape index: {}]
  %s3 = inlined_call_operand.vmem [shape: f32[1,512], index: 3, kind: input, shape index: {}]
  %s4 = inlined_call_operand.hbm [shape: bf16[512,128], index: 4, kind: input, shape index: {}]
  %s5 = inlined_call_operand.hbm [shape: bf16[512,128], index: 5, kind: input, shape index: {}]
  %s6 = inlined_call_operand.vmem [shape: f32[1,128], index: 6, kind: input, shape index: {}]
  %s7 = inlined_call_operand.hbm [shape: f32[16,128], index: 7, kind: output, shape index: {}]
  %s8 = sld [smem:[#allocation0]]
  $region89: #{tpu_custom_call.1} parent=0
    _
  %s10 = ssub.s32 1, %s8
  %s11 = scalar_select 0, %s10, %s8
  $region1: #{tpu_custom_call.1} parent=0
    #allocation3 [shape = 'u8[512]{0}', space=smem, size = 0x200, scoped, tag = 'input window, operand 0, single buffered']
    #allocation4 [shape = 's32[2]{0}', space=sflag, size = 0x8, scoped, tag = 'scoped memory for tpu_custom_call.1']
    #allocation5 [shape = 's32[2]{0}', space=sflag, size = 0x8, scoped, tag = 'scoped memory for tpu_custom_call.1']
    #allocation6 [shape = 's32[2]{0}', space=sflag, size = 0x8, scoped, tag = 'scoped memory for tpu_custom_call.1']
    #allocation7 [shape = 'u8[4096]{0}', space=vmem, size = 0x1000, scoped, tag = 'input window, operand 1, single buffered']
    #allocation8 [shape = 'u8[131072]{0}', space=vmem, size = 0x20000, scoped, tag = 'input window, operand 2']
    #allocation9 [shape = 's32[2]{0}', space=sflag, size = 0x8, scoped, tag = 'scoped memory for tpu_custom_call.1']
    #allocation10 [shape = 'u8[131072]{0}', space=vmem, size = 0x20000, scoped, tag = 'input window, operand 4']
    #allocation11 [shape = 'u8[131072]{0}', space=vmem, size = 0x20000, scoped, tag = 'input window, operand 5']
    #allocation12 [shape = 's32[2]{0}', space=sflag, size = 0x8, scoped, tag = 'scoped memory for tpu_custom_call.1']
    #allocation13 [shape = 'u8[8192]{0}', space=vmem, size = 0x2000, scoped, tag = 'output window, operand 0, single buffered']
    %12 = vsyncpa [#allocation6], 0
    %13 = vsyncpa [#allocation4], 0
    %14 = vsyncpa [#allocation9], 0
    %s15 = scalar_lea.sflag [#allocation9], 1
    %16 = vsyncpa %s15, 0
    %17 = vsyncpa [#allocation12], 0
    %s18 = scalar_lea.sflag [#allocation12], 1
    %19 = vsyncpa %s18, 0
    %20 = vsyncpa [#allocation5], 0
    loop: start=0, step=1, limit=4
    $region2: #{tpu_custom_call.1} parent=1 // loop_pre_header
      _
    $region3: #{tpu_custom_call.1} parent=1 // loop_header
      %s22 = sphi 0, %s26
      %p23 = scmp.ge.s32.totalorder %s22, 4
      %s29 = sphi 0, %s41
      %s30 = sphi 0, %s37
      %s31 = sphi 0, %s29
      %s32 = sphi 0, %s30
      %s33 = sphi 0, %s31
      %s34 = sphi 0, %s32
      %s42 = sphi 0, %s42
      %s44 = sphi 0, %s42
      %s45 = sphi 0, %s44
      %s59 = sphi 0, %s45
      %s65 = sphi 0, %s67
      %s68 = sphi 0, %s65
      %s69 = sphi 0, %s68
      %s85 = sphi 0, %s69
      %s91 = sphi 0, %s93
      %s94 = sphi 0, %s91
      %s95 = sphi 0, %s94
      %s111 = sphi 0, %s95
      %s117 = sphi 0, %s119
      %s120 = sphi 0, %s117
      %s121 = sphi 0, %s120
      %s137 = sphi 0, %s121
      %s143 = sphi 0, %s145
      %s146 = sphi 0, %s143
      %s147 = sphi 0, %s146
      %s163 = sphi 0, %s147
      %s169 = sphi 0, %s171
      %s172 = sphi 0, %s169
      %s173 = sphi 0, %s172
      %s189 = sphi 0, %s173
      %s193 = sphi 0, %s193
      %s195 = sphi 0, %s193
      %s196 = sphi 0, %s195
      %s210 = sphi 0, %s196
      %s216 = sphi 0, %s218
      %s219 = sphi 0, %s216
      %s220 = sphi 0, %s219
      %s236 = sphi 0, %s220
    $region4: #{tpu_custom_call.1} parent=1 // loop_header_branch
      %25 = sbr.rel (%p23) target = $region8
    $region5: #{tpu_custom_call.1} parent=1 // loop_body
      %s27 = ssub.s32 %s22, 1
      %s28 = ssub.s32 %s22, 2
      %s35 = sadd.s32 1, %s30
      %p36 = scmp.ge.s32.totalorder %s35, 2
      %s37 = scalar_select %p36, 0, %s35
      %s38 = sadd.s32 1, %s29
      %s39 = scalar_select %p36, %s38, %s29
      %p40 = scmp.ge.s32.totalorder %s39, 1
      %s41 = scalar_select %p40, 0, %s39
      %s43 = sadd.s32 %s42, 1
      %p46 = scmp.eq.s32.totalorder %s22, 1
      %p47 = scmp.ne.s32.totalorder %s42, %s44
      %p48 = scmp.eq.s32.totalorder %s22, 0
      %p49 = por %p47, %p48
      %p50 = scmp.ne.s32.totalorder %s42, %s44
      %p51 = scmp.eq.s32.totalorder %s27, 1
      %p52 = por %p50, %p51
      %p53 = scmp.ne.s32.totalorder %s44, %s45
      %p54 = scmp.eq.s32.totalorder %s27, 0
      %p55 = por %p53, %p54
      %p56 = scmp.ne.s32.totalorder %s44, %s45
      %p57 = scmp.eq.s32.totalorder %s28, 1
      %p58 = por %p56, %p57
      %p60 = scmp.ne.s32.totalorder %s45, %s59
      %p61 = scmp.eq.s32.totalorder %s28, 0
      %p62 = por %p60, %p61
      %s63 = ssub.s32 %s29, %s41
      %p64 = scmp.eq.s32.totalorder %s63, 0
      %s66 = sadd.s32 %s65, 1
      %s67 = scalar_select %p64, %s65, %s66
      %p70 = pneg %p64
      %p71 = scmp.eq.s32.totalorder %s22, 1
      %p72 = por %p70, %p71
      %p73 = scmp.ne.s32.totalorder %s65, %s68
      %p74 = scmp.eq.s32.totalorder %s22, 0
      %p75 = por %p73, %p74
      %p76 = scmp.ne.s32.totalorder %s65, %s68
      %p77 = scmp.eq.s32.totalorder %s27, 1
      %p78 = por %p76, %p77
      %p79 = scmp.ne.s32.totalorder %s68, %s69
      %p80 = scmp.eq.s32.totalorder %s27, 0
      %p81 = por %p79, %p80
      %p82 = scmp.ne.s32.totalorder %s68, %s69
      %p83 = scmp.eq.s32.totalorder %s28, 1
      %p84 = por %p82, %p83
      %p86 = scmp.ne.s32.totalorder %s69, %s85
      %p87 = scmp.eq.s32.totalorder %s28, 0
      %p88 = por %p86, %p87
      %s89 = ssub.s32 %s30, %s37
      %p90 = scmp.eq.s32.totalorder %s89, 0
      %s92 = sadd.s32 %s91, 1
      %s93 = scalar_select %p90, %s91, %s92
      %p96 = pneg %p90
      %p97 = scmp.eq.s32.totalorder %s22, 1
      %p98 = por %p96, %p97
      %p99 = scmp.ne.s32.totalorder %s91, %s94
      %p100 = scmp.eq.s32.totalorder %s22, 0
      %p101 = por %p99, %p100
      %p102 = scmp.ne.s32.totalorder %s91, %s94
      %p103 = scmp.eq.s32.totalorder %s27, 1
      %p104 = por %p102, %p103
      %p105 = scmp.ne.s32.totalorder %s94, %s95
      %p106 = scmp.eq.s32.totalorder %s27, 0
      %p107 = por %p105, %p106
      %p108 = scmp.ne.s32.totalorder %s94, %s95
      %p109 = scmp.eq.s32.totalorder %s28, 1
      %p110 = por %p108, %p109
      %p112 = scmp.ne.s32.totalorder %s95, %s111
      %p113 = scmp.eq.s32.totalorder %s28, 0
      %p114 = por %p112, %p113
      %s115 = ssub.s32 %s30, %s37
      %p116 = scmp.eq.s32.totalorder %s115, 0
      %s118 = sadd.s32 %s117, 1
      %s119 = scalar_select %p116, %s117, %s118
      %p122 = pneg %p116
      %p123 = scmp.eq.s32.totalorder %s22, 1
      %p124 = por %p122, %p123
      %p125 = scmp.ne.s32.totalorder %s117, %s120
      %p126 = scmp.eq.s32.totalorder %s22, 0
      %p127 = por %p125, %p126
      %p128 = scmp.ne.s32.totalorder %s117, %s120
      %p129 = scmp.eq.s32.totalorder %s27, 1
      %p130 = por %p128, %p129
      %p131 = scmp.ne.s32.totalorder %s120, %s121
      %p132 = scmp.eq.s32.totalorder %s27, 0
      %p133 = por %p131, %p132
      %p134 = scmp.ne.s32.totalorder %s120, %s121
      %p135 = scmp.eq.s32.totalorder %s28, 1
      %p136 = por %p134, %p135
      %p138 = scmp.ne.s32.totalorder %s121, %s137
      %p139 = scmp.eq.s32.totalorder %s28, 0
      %p140 = por %p138, %p139
      %s141 = ssub.s32 %s30, %s37
      %p142 = scmp.eq.s32.totalorder %s141, 0
      %s144 = sadd.s32 %s143, 1
      %s145 = scalar_select %p142, %s143, %s144
      %p148 = pneg %p142
      %p149 = scmp.eq.s32.totalorder %s22, 1
      %p150 = por %p148, %p149
      %p151 = scmp.ne.s32.totalorder %s143, %s146
      %p152 = scmp.eq.s32.totalorder %s22, 0
      %p153 = por %p151, %p152
      %p154 = scmp.ne.s32.totalorder %s143, %s146
      %p155 = scmp.eq.s32.totalorder %s27, 1
      %p156 = por %p154, %p155
      %p157 = scmp.ne.s32.totalorder %s146, %s147
      %p158 = scmp.eq.s32.totalorder %s27, 0
      %p159 = por %p157, %p158
      %p160 = scmp.ne.s32.totalorder %s146, %s147
      %p161 = scmp.eq.s32.totalorder %s28, 1
      %p162 = por %p160, %p161
      %p164 = scmp.ne.s32.totalorder %s147, %s163
      %p165 = scmp.eq.s32.totalorder %s28, 0
      %p166 = por %p164, %p165
      %s167 = ssub.s32 %s30, %s37
      %p168 = scmp.eq.s32.totalorder %s167, 0
      %s170 = sadd.s32 %s169, 1
      %s171 = scalar_select %p168, %s169, %s170
      %p174 = pneg %p168
      %p175 = scmp.eq.s32.totalorder %s22, 1
      %p176 = por %p174, %p175
      %p177 = scmp.ne.s32.totalorder %s169, %s172
      %p178 = scmp.eq.s32.totalorder %s22, 0
      %p179 = por %p177, %p178
      %p180 = scmp.ne.s32.totalorder %s169, %s172
      %p181 = scmp.eq.s32.totalorder %s27, 1
      %p182 = por %p180, %p181
      %p183 = scmp.ne.s32.totalorder %s172, %s173
      %p184 = scmp.eq.s32.totalorder %s27, 0
      %p185 = por %p183, %p184
      %p186 = scmp.ne.s32.totalorder %s172, %s173
      %p187 = scmp.eq.s32.totalorder %s28, 1
      %p188 = por %p186, %p187
      %p190 = scmp.ne.s32.totalorder %s173, %s189
      %p191 = scmp.eq.s32.totalorder %s28, 0
      %p192 = por %p190, %p191
      %s194 = sadd.s32 %s193, 1
      %p197 = scmp.eq.s32.totalorder %s22, 1
      %p198 = scmp.ne.s32.totalorder %s193, %s195
      %p199 = scmp.eq.s32.totalorder %s22, 0
      %p200 = por %p198, %p199
      %p201 = scmp.ne.s32.totalorder %s193, %s195
      %p202 = scmp.eq.s32.totalorder %s27, 1
      %p203 = por %p201, %p202
      %p204 = scmp.ne.s32.totalorder %s195, %s196
      %p205 = scmp.eq.s32.totalorder %s27, 0
      %p206 = por %p204, %p205
      %p207 = scmp.ne.s32.totalorder %s195, %s196
      %p208 = scmp.eq.s32.totalorder %s28, 1
      %p209 = por %p207, %p208
      %p211 = scmp.ne.s32.totalorder %s196, %s210
      %p212 = scmp.eq.s32.totalorder %s28, 0
      %p213 = por %p211, %p212
      %s214 = ssub.s32 %s29, %s41
      %p215 = scmp.eq.s32.totalorder %s214, 0
      %s217 = sadd.s32 %s216, 1
      %s218 = scalar_select %p215, %s216, %s217
      %p221 = pneg %p215
      %p222 = scmp.eq.s32.totalorder %s22, 1
      %p223 = por %p221, %p222
      %p224 = scmp.ne.s32.totalorder %s216, %s219
      %p225 = scmp.eq.s32.totalorder %s22, 0
      %p226 = por %p224, %p225
      %p227 = scmp.ne.s32.totalorder %s216, %s219
      %p228 = scmp.eq.s32.totalorder %s27, 1
      %p229 = por %p227, %p228
      %p230 = scmp.ne.s32.totalorder %s219, %s220
      %p231 = scmp.eq.s32.totalorder %s27, 0
      %p232 = por %p230, %p231
      %p233 = scmp.ne.s32.totalorder %s219, %s220
      %p234 = scmp.eq.s32.totalorder %s28, 1
      %p235 = por %p233, %p234
      %p237 = scmp.ne.s32.totalorder %s220, %s236
      %p238 = scmp.eq.s32.totalorder %s28, 0
      %p239 = por %p237, %p238
      %p240 = scmp.le.s32.totalorder 1, %s22
      %p241 = scmp.lt.s32.totalorder %s22, 3
      %p242 = pnand %p240, %p241
      %p243 = pneg %p242
      // Predicated region
      $region9: #{tpu_custom_call.1} parent=5 // pred_check
        _
      $region10: #{tpu_custom_call.1} parent=5 // pred_check_branch
        %245 = sbr.rel (%p242) target = $region12
      $region11: #{tpu_custom_call.1} parent=5 // pred_region
        %s246 = ssub.s32 %s22, 1
        // Predicated region
        $region13: #{tpu_custom_call.1} parent=11 // pred_check
          %p247 = pneg %p55
        $region14: #{tpu_custom_call.1} parent=11 // pred_check_branch
          %249 = sbr.rel (%p247) target = $region16
        $region15: #{tpu_custom_call.1} parent=11 // pred_region
          %s251 = ssub.s32 16, 16
          %252 = vsyncadd [#allocation6], %s251
          %255 = dma.hbm_to_smem %s0, 16, [#allocation3], [#allocation6]
        $region16: #{tpu_custom_call.1} parent=11 // pred_fallthru
          _
        // Predicated region
        $region17: #{tpu_custom_call.1} parent=11 // pred_check
          %p256 = pneg %p81
        $region18: #{tpu_custom_call.1} parent=11 // pred_check_branch
          %258 = sbr.rel (%p256) target = $region20
        $region19: #{tpu_custom_call.1} parent=11 // pred_region
          %s259 = smul.u32 2, %s31
          %s261 = ssub.s32 128, 128
          %262 = vsyncadd [#allocation4], %s261
          %s263 = smul.addr %s259, 64
          %s264 = scalar_lea.hbm %s1, %s263
          %s265 = sshll.u32 [#allocation7], 4
          %s266 = int_to_ptr.vmem [resolvable:$true] %s265
          %271 = dma.hbm_to_vmem [thread:$0]  %s264, 128, %s266, [#allocation4], 64, 64, 4
        $region20: #{tpu_custom_call.1} parent=11 // pred_fallthru
          _
        // Predicated region
        $region21: #{tpu_custom_call.1} parent=11 // pred_check
          %p272 = pneg %p206
        $region22: #{tpu_custom_call.1} parent=11 // pred_check_branch
          %274 = sbr.rel (%p272) target = $region24
        $region23: #{tpu_custom_call.1} parent=11 // pred_region
          _
        $region24: #{tpu_custom_call.1} parent=11 // pred_fallthru
          _
      $region12: #{tpu_custom_call.1} parent=5 // pred_fallthru
        _
      %p275 = scmp.lt.s32.totalorder %s22, 2
      // Predicated region
      $region25: #{tpu_custom_call.1} parent=5 // pred_check
        %p276 = pneg %p275
      $region26: #{tpu_custom_call.1} parent=5 // pred_check_branch
        %278 = sbr.rel (%p276) target = $region28
      $region27: #{tpu_custom_call.1} parent=5 // pred_region
        // Predicated region
        $region29: #{tpu_custom_call.1} parent=27 // pred_check
          %p279 = pneg %p101
        $region30: #{tpu_custom_call.1} parent=27 // pred_check_branch
          %281 = sbr.rel (%p279) target = $region32
        $region31: #{tpu_custom_call.1} parent=27 // pred_region
          %s282 = sand.u32 %s22, 1
          %s283 = scalar_lea.sflag [#allocation9], %s282
          %s284 = sand.u32 %s91, 1
          %s285 = smul.addr %s284, 128
          %s286 = scalar_lea.vmem [#allocation8], %s285
          %s287 = smul.u32 2, %s30
          %s289 = ssub.s32 2048, 2048
          %290 = vsyncadd %s283, %s289
          %s291 = smul.addr %s287, 64
          %s292 = scalar_lea.hbm %s2, %s291
          %s293 = sshll.u32 %s286, 4
          %s294 = int_to_ptr.vmem [resolvable:$true] %s293
          %299 = dma.hbm_to_vmem [thread:$0]  %s292, 2048, %s294, %s283, 256, 128, 8
        $region32: #{tpu_custom_call.1} parent=27 // pred_fallthru
          _
        // Predicated region
        $region33: #{tpu_custom_call.1} parent=27 // pred_check
          %p300 = pneg %p127
        $region34: #{tpu_custom_call.1} parent=27 // pred_check_branch
          %302 = sbr.rel (%p300) target = $region36
        $region35: #{tpu_custom_call.1} parent=27 // pred_region
          %s303 = smul.u32 2, %s30
          %p304 = scmp.lt.s32.totalorder %s303, 3
          %s305 = scalar_select %p304, %s303, 3
          %s306 = scalar_lea.vmem %s3, %s305
          %s307 = smul.u32 2, %s30
        $region36: #{tpu_custom_call.1} parent=27 // pred_fallthru
          _
        // Predicated region
        $region37: #{tpu_custom_call.1} parent=27 // pred_check
          %p308 = pneg %p153
        $region38: #{tpu_custom_call.1} parent=27 // pred_check_branch
          %310 = sbr.rel (%p308) target = $region40
        $region39: #{tpu_custom_call.1} parent=27 // pred_region
          %s311 = sand.u32 %s22, 1
          %s312 = scalar_lea.sflag [#allocation9], %s311
          %s313 = sand.u32 %s143, 1
          %s314 = smul.addr %s313, 128
          %s315 = scalar_lea.vmem [#allocation10], %s314
          %s316 = smul.u32 32, %s30
          %s318 = ssub.s32 2048, 2048
          %319 = vsyncadd %s312, %s318
          %s320 = smul.addr %s316, 64
          %s321 = scalar_lea.hbm %s4, %s320
          %s322 = sshll.u32 %s315, 4
          %s323 = int_to_ptr.vmem [resolvable:$true] %s322
          %328 = dma.hbm_to_vmem [thread:$0]  %s321, 2048, %s323, %s312, 64, 64, 4
        $region40: #{tpu_custom_call.1} parent=27 // pred_fallthru
          _
        // Predicated region
        $region41: #{tpu_custom_call.1} parent=27 // pred_check
          %p329 = pneg %p179
        $region42: #{tpu_custom_call.1} parent=27 // pred_check_branch
          %331 = sbr.rel (%p329) target = $region44
        $region43: #{tpu_custom_call.1} parent=27 // pred_region
          %s332 = sand.u32 %s169, 1
          %s333 = scalar_lea.sflag [#allocation12], %s332
          %s334 = sand.u32 %s169, 1
          %s335 = smul.addr %s334, 128
          %s336 = scalar_lea.vmem [#allocation11], %s335
          %s337 = smul.u32 32, %s30
          %s339 = ssub.s32 2048, 2048
          %340 = vsyncadd %s333, %s339
          %s341 = smul.addr %s337, 64
          %s342 = scalar_lea.hbm %s5, %s341
          %s343 = sshll.u32 %s336, 4
          %s344 = int_to_ptr.vmem [resolvable:$true] %s343
          %349 = dma.hbm_to_vmem [thread:$0]  %s342, 2048, %s344, %s333, 64, 64, 4
        $region44: #{tpu_custom_call.1} parent=27 // pred_fallthru
          _
      $region28: #{tpu_custom_call.1} parent=5 // pred_fallthru
        _
      %p350 = scmp.le.s32.totalorder 1, %s22
      %p351 = scmp.lt.s32.totalorder %s22, 3
      %p352 = pnand %p350, %p351
      %p353 = pneg %p352
      // Predicated region
      $region45: #{tpu_custom_call.1} parent=5 // pred_check
        _
      $region46: #{tpu_custom_call.1} parent=5 // pred_check_branch
        %355 = sbr.rel (%p352) target = $region48
      $region47: #{tpu_custom_call.1} parent=5 // pred_region
        %s356 = ssub.s32 %s22, 1
        // Predicated region
        $region49: #{tpu_custom_call.1} parent=47 // pred_check
          %p357 = pneg %p55
        $region50: #{tpu_custom_call.1} parent=47 // pred_check_branch
          %359 = sbr.rel (%p357) target = $region52
        $region51: #{tpu_custom_call.1} parent=47 // pred_region
          %360 = dma.done [#allocation6], 16
        $region52: #{tpu_custom_call.1} parent=47 // pred_fallthru
          _
        // Predicated region
        $region53: #{tpu_custom_call.1} parent=47 // pred_check
          %p361 = pneg %p81
        $region54: #{tpu_custom_call.1} parent=47 // pred_check_branch
          %363 = sbr.rel (%p361) target = $region56
        $region55: #{tpu_custom_call.1} parent=47 // pred_region
          %364 = dma.done [#allocation4], 128
        $region56: #{tpu_custom_call.1} parent=47 // pred_fallthru
          _
        %s365 = sand.u32 %s27, 1
        %s366 = scalar_lea.sflag [#allocation9], %s365
        %s367 = sand.u32 %s94, 1
        %s368 = smul.addr %s367, 128
        %s369 = scalar_lea.vmem [#allocation8], %s368
        // Predicated region
        $region57: #{tpu_custom_call.1} parent=47 // pred_check
          %p370 = pneg %p107
        $region58: #{tpu_custom_call.1} parent=47 // pred_check_branch
          %372 = sbr.rel (%p370) target = $region60
        $region59: #{tpu_custom_call.1} parent=47 // pred_region
          %373 = dma.done %s366, 2048
        $region60: #{tpu_custom_call.1} parent=47 // pred_fallthru
          _
        %s374 = sand.u32 %s27, 1
        %s375 = scalar_lea.sflag [#allocation9], %s374
        %s376 = sand.u32 %s146, 1
        %s377 = smul.addr %s376, 128
        %s378 = scalar_lea.vmem [#allocation10], %s377
        // Predicated region
        $region61: #{tpu_custom_call.1} parent=47 // pred_check
          %p379 = pneg %p159
        $region62: #{tpu_custom_call.1} parent=47 // pred_check_branch
          %381 = sbr.rel (%p379) target = $region64
        $region63: #{tpu_custom_call.1} parent=47 // pred_region
          %382 = dma.done %s375, 2048
        $region64: #{tpu_custom_call.1} parent=47 // pred_fallthru
          _
        %s383 = sand.u32 %s172, 1
        %s384 = scalar_lea.sflag [#allocation12], %s383
        %s385 = sand.u32 %s172, 1
        %s386 = smul.addr %s385, 128
        %s387 = scalar_lea.vmem [#allocation11], %s386
        // Predicated region
        $region65: #{tpu_custom_call.1} parent=47 // pred_check
          %p388 = pneg %p185
        $region66: #{tpu_custom_call.1} parent=47 // pred_check_branch
          %390 = sbr.rel (%p388) target = $region68
        $region67: #{tpu_custom_call.1} parent=47 // pred_region
          %391 = dma.done %s384, 2048
        $region68: #{tpu_custom_call.1} parent=47 // pred_fallthru
          _
        %392 = sfence
        %p393 = pneg %p55
        %p394 = pneg %p52
        %p395 = pneg %p81
        %p396 = pneg %p78
        %s397 = sand.u32 %s27, 1
        %s398 = scalar_lea.sflag [#allocation9], %s397
        %s399 = sand.u32 %s94, 1
        %s400 = smul.addr %s399, 128
        %s401 = scalar_lea.vmem [#allocation8], %s400
        %p402 = pneg %p107
        %p403 = pneg %p104
        %s404 = smul.u32 2, %s32
        %p405 = scmp.lt.s32.totalorder %s404, 3
        %s406 = scalar_select %p405, %s404, 3
        %s407 = scalar_lea.vmem %s3, %s406
        %p408 = pneg %p133
        %p409 = pneg %p130
        %s410 = sand.u32 %s27, 1
        %s411 = scalar_lea.sflag [#allocation9], %s410
        %s412 = sand.u32 %s146, 1
        %s413 = smul.addr %s412, 128
        %s414 = scalar_lea.vmem [#allocation10], %s413
        %p415 = pneg %p159
        %p416 = pneg %p156
        %s417 = sand.u32 %s172, 1
        %s418 = scalar_lea.sflag [#allocation12], %s417
        %s419 = sand.u32 %s172, 1
        %s420 = smul.addr %s419, 128
        %s421 = scalar_lea.vmem [#allocation11], %s420
        %p422 = pneg %p185
        %p423 = pneg %p182
        %p424 = pneg %p206
        %p425 = pneg %p203
        %p426 = pneg %p232
        %p427 = pneg %p229
        %s428 = smul.u32 2, %s31
        %s429 = smul.u32 2, %s32
        %s430 = smul.u32 2, %s32
        %p431 = scmp.lt.s32.totalorder %s430, 3
        %s432 = scalar_select %p431, %s430, 3
        %s433 = scalar_lea.vmem %s3, %s432
        %s434 = smul.u32 2, %s32
        %s435 = smul.u32 32, %s32
        %s436 = smul.u32 32, %s32
        %s437 = smul.u32 2, %s31
        %p439 = scmp.eq.s32.totalorder %s32, 0
        // Predicated region
        $region69: #{tpu_custom_call.1} parent=47 // pred_check
          %p440 = pneg %p439
        $region70: #{tpu_custom_call.1} parent=47 // pred_check_branch
          %442 = sbr.rel (%p440) target = $region72
        $region71: #{tpu_custom_call.1} parent=47 // pred_region
          %443 = vst [vmem:[#allocation2] sm:$0xff] 0.0
          %444 = vst [vmem:[#allocation2 + $0x8] sm:$0xff] 0.0
        $region72: #{tpu_custom_call.1} parent=47 // pred_fallthru
          _
        %s445 = sld [smem:[#allocation3]]
        %s446 = sld [smem:[#allocation3 + $0x1]]
        %v447 = vld [vmem:[#allocation7] sm:$0xf]
        %v448 = vld [vmem:[#allocation7 + $0x4] sm:$0xf]
        %v449 = vld [vmem:[%s369] sm:$0xff]
        %v450 = vld [vmem:[%s369 + $0x8] sm:$0xff]
        %v451 = vld [vmem:[%s369 + $0x10] sm:$0xff]
        %v452 = vld [vmem:[%s369 + $0x18] sm:$0xff]
        %v453 = vld [vmem:[%s369 + $0x20] sm:$0xff]
        %v454 = vld [vmem:[%s369 + $0x28] sm:$0xff]
        %v455 = vld [vmem:[%s369 + $0x30] sm:$0xff]
        %v456 = vld [vmem:[%s369 + $0x38] sm:$0xff]
        %v457 = vld [vmem:[%s369 + $0x40] sm:$0xff]
        %v458 = vld [vmem:[%s369 + $0x48] sm:$0xff]
        %v459 = vld [vmem:[%s369 + $0x50] sm:$0xff]
        %v460 = vld [vmem:[%s369 + $0x58] sm:$0xff]
        %v461 = vld [vmem:[%s369 + $0x60] sm:$0xff]
        %v462 = vld [vmem:[%s369 + $0x68] sm:$0xff]
        %v463 = vld [vmem:[%s369 + $0x70] sm:$0xff]
        %v464 = vld [vmem:[%s369 + $0x78] sm:$0xff]
        %v465 = vld [vmem:[%s433] sm:$0x3]
        %v467 = vlaneseq
        %v468 = vshrl.u32 %v467, 7
        %v469 = vsub.s32 0, %v468
        %v470 = vrot.slane %v465, %v469
        %v471 = vlaneseq
        %v472 = vshrl.u32 %v471, 7
        %v473 = vsub.s32 1, %v472
        %v474 = vrot.slane %v465, %v473
        %v479 = vunpack.c.l.b16 %v447
        %v480 = vunpack.c.l.b16 %v448
        %v481 = vpack.c.b16 %v480, %v479
        %v499 = vunpack.c.l.b16 %v449
        %v500 = vunpack.c.h.b16 %v449
        %v501 = vunpack.c.l.b16 %v450
        %v502 = vunpack.c.h.b16 %v450
        %v503 = vunpack.c.l.b16 %v451
        %v504 = vunpack.c.h.b16 %v451
        %v505 = vunpack.c.l.b16 %v452
        %v506 = vunpack.c.h.b16 %v452
        %v507 = vunpack.c.l.b16 %v453
        %v508 = vunpack.c.h.b16 %v453
        %v509 = vunpack.c.l.b16 %v454
        %v510 = vunpack.c.h.b16 %v454
        %v511 = vunpack.c.l.b16 %v455
        %v512 = vunpack.c.h.b16 %v455
        %v513 = vunpack.c.l.b16 %v456
        %v514 = vunpack.c.h.b16 %v456
        %v515 = vunpack.c.l.b16 %v457
        %v516 = vunpack.c.h.b16 %v457
        %v517 = vunpack.c.l.b16 %v458
        %v518 = vunpack.c.h.b16 %v458
        %v519 = vunpack.c.l.b16 %v459
        %v520 = vunpack.c.h.b16 %v459
        %v521 = vunpack.c.l.b16 %v460
        %v522 = vunpack.c.h.b16 %v460
        %v523 = vunpack.c.l.b16 %v461
        %v524 = vunpack.c.h.b16 %v461
        %v525 = vunpack.c.l.b16 %v462
        %v526 = vunpack.c.h.b16 %v462
        %v527 = vunpack.c.l.b16 %v463
        %v528 = vunpack.c.h.b16 %v463
        %v529 = vunpack.c.l.b16 %v464
        %v530 = vunpack.c.h.b16 %v464
        %v531 = vpack.c.b16 %v501, %v499
        %v532 = vpack.c.b16 %v502, %v500
        %v533 = vpack.c.b16 %v505, %v503
        %v534 = vpack.c.b16 %v506, %v504
        %v535 = vpack.c.b16 %v509, %v507
        %v536 = vpack.c.b16 %v510, %v508
        %v537 = vpack.c.b16 %v513, %v511
        %v538 = vpack.c.b16 %v514, %v512
        %v539 = vpack.c.b16 %v517, %v515
        %v540 = vpack.c.b16 %v518, %v516
        %v541 = vpack.c.b16 %v521, %v519
        %v542 = vpack.c.b16 %v522, %v520
        %v543 = vpack.c.b16 %v525, %v523
        %v544 = vpack.c.b16 %v526, %v524
        %v545 = vpack.c.b16 %v529, %v527
        %v546 = vpack.c.b16 %v530, %v528
        %563 = vmatprep.subr.bf16.mxu0 %v546
        %564 = vmatpush1.bf16.msra.mxu0 %v545
        %565 = vmatprep.subr.bf16.mxu0 %v544
        %566 = vmatpush1.bf16.msra.mxu0 %v543
        %567 = vmatprep.subr.bf16.mxu0 %v542
        %568 = vmatpush1.bf16.msra.mxu0 %v541
        %569 = vmatprep.subr.bf16.mxu0 %v540
        %570 = vmatpush1.bf16.msra.mxu0 %v539
        %571 = vmatprep.subr.bf16.mxu0 %v538
        %572 = vmatpush1.bf16.msra.mxu0 %v537
        %573 = vmatprep.subr.bf16.mxu0 %v536
        %574 = vmatpush1.bf16.msra.mxu0 %v535
        %575 = vmatprep.subr.bf16.mxu0 %v534
        %576 = vmatpush1.bf16.msra.mxu0 %v533
        %577 = vmatprep.subr.bf16.mxu0 %v532
        %578 = vmatpush1.bf16.msra.mxu0 %v531
        %579 = vmatprep.subr.bf16.mxu0 0
        %580 = vmatpush2.bf16.msra.mxu0 0
        %581 = vmatprep.subr.bf16.mxu0 0
        %582 = vmatpush2.bf16.msra.mxu0 0
        %583 = vmatprep.subr.bf16.mxu0 0
        %584 = vmatpush2.bf16.msra.mxu0 0
        %585 = vmatprep.subr.bf16.mxu0 0
        %586 = vmatpush2.bf16.msra.mxu0 0
        %587 = vmatprep.subr.bf16.mxu0 0
        %588 = vmatpush2.bf16.msra.mxu0 0
        %589 = vmatprep.subr.bf16.mxu0 0
        %590 = vmatpush2.bf16.msra.mxu0 0
        %591 = vmatprep.subr.bf16.mxu0 0
        %592 = vmatpush2.bf16.msra.mxu0 0
        %593 = vmatprep.subr.bf16.mxu0 0
        %594 = vmatpush2.bf16.msra.mxu0 0
        %595 = vmatprep.mubr.bf16.mxu0 0
        %596 = vmatmul.mubr.bf16.gmra.mxu0 %v481
        %v597 = vpop.f32.mrf.mxu0
        %v598 = vadd.f32 %v470, %v597
        %v599 = vpop.f32.mrf.mxu0
        %v600 = vadd.f32 %v474, %v599
        %v601 = vpop.f32.mrf.mxu0
        %v602 = vadd.f32 %v470, %v601
        %v603 = vpop.f32.mrf.mxu0
        %v604 = vadd.f32 %v474, %v603
        %605 = vdwg.mxu0
        %v606 = vstv %s445
        %v607 = vsub.f32 %v598, %v606
        %v608 = vsub.f32 %v600, %v606
        %v609 = vsub.f32 %v602, %v606
        %v610 = vsub.f32 %v604, %v606
        %v611 = vmul.f32 %v607, 0.5
        %v612 = vmul.f32 %v608, 0.5
        %v613 = vmul.f32 %v609, 0.5
        %v614 = vmul.f32 %v610, 0.5
        %v615 = vmul.f32 %v607, 0.044715
        %v616 = vmul.f32 %v608, 0.044715
        %v617 = vmul.f32 %v609, 0.044715
        %v618 = vmul.f32 %v610, 0.044715
        %v619 = vmul.f32 %v615, %v607
        %v620 = vmul.f32 %v616, %v608
        %v621 = vmul.f32 %v617, %v609
        %v622 = vmul.f32 %v618, %v610
        %v623 = vmul.f32 %v619, %v607
        %v624 = vmul.f32 %v620, %v608
        %v625 = vmul.f32 %v621, %v609
        %v626 = vmul.f32 %v622, %v610
        %v627 = vadd.f32 %v607, %v623
        %v628 = vadd.f32 %v608, %v624
        %v629 = vadd.f32 %v609, %v625
        %v630 = vadd.f32 %v610, %v626
        %v631 = vmul.f32 %v627, 0.7978846
        %v632 = vmul.f32 %v628, 0.7978846
        %v633 = vmul.f32 %v629, 0.7978846
        %v634 = vmul.f32 %v630, 0.7978846
        %v635 = vtanh.pop %v631
        %v636 = vtanh.pop %v632
        %v637 = vtanh.pop %v633
        %v638 = vtanh.pop %v634
        %v639 = vadd.f32 %v635, 1.0
        %v640 = vadd.f32 %v636, 1.0
        %v641 = vadd.f32 %v637, 1.0
        %v642 = vadd.f32 %v638, 1.0
        %v643 = vmul.f32 %v611, %v639
        %v644 = vmul.f32 %v612, %v640
        %v645 = vmul.f32 %v613, %v641
        %v646 = vmul.f32 %v614, %v642
        %v647 = vstv %s446
        %v648 = vsub.f32 %v643, %v647
        %v649 = vsub.f32 %v644, %v647
        %v650 = vsub.f32 %v645, %v647
        %v651 = vsub.f32 %v646, %v647
        %v652 = vadd.f32 %v598, %v606
        %v653 = vadd.f32 %v600, %v606
        %v654 = vadd.f32 %v602, %v606
        %v655 = vadd.f32 %v604, %v606
        %v656 = vmul.f32 %v652, 0.5
        %v657 = vmul.f32 %v653, 0.5
        %v658 = vmul.f32 %v654, 0.5
        %v659 = vmul.f32 %v655, 0.5
        %v660 = vmul.f32 %v652, 0.044715
        %v661 = vmul.f32 %v653, 0.044715
        %v662 = vmul.f32 %v654, 0.044715
        %v663 = vmul.f32 %v655, 0.044715
        %v664 = vmul.f32 %v660, %v652
        %v665 = vmul.f32 %v661, %v653
        %v666 = vmul.f32 %v662, %v654
        %v667 = vmul.f32 %v663, %v655
        %v668 = vmul.f32 %v664, %v652
        %v669 = vmul.f32 %v665, %v653
        %v670 = vmul.f32 %v666, %v654
        %v671 = vmul.f32 %v667, %v655
        %v672 = vadd.f32 %v652, %v668
        %v673 = vadd.f32 %v653, %v669
        %v674 = vadd.f32 %v654, %v670
        %v675 = vadd.f32 %v655, %v671
        %v676 = vmul.f32 %v672, 0.7978846
        %v677 = vmul.f32 %v673, 0.7978846
        %v678 = vmul.f32 %v674, 0.7978846
        %v679 = vmul.f32 %v675, 0.7978846
        %v680 = vtanh.pop %v676
        %v681 = vtanh.pop %v677
        %v682 = vtanh.pop %v678
        %v683 = vtanh.pop %v679
        %v684 = vadd.f32 %v680, 1.0
        %v685 = vadd.f32 %v681, 1.0
        %v686 = vadd.f32 %v682, 1.0
        %v687 = vadd.f32 %v683, 1.0
        %v688 = vmul.f32 %v656, %v684
        %v689 = vmul.f32 %v657, %v685
        %v690 = vmul.f32 %v658, %v686
        %v691 = vmul.f32 %v659, %v687
        %v692 = vsub.f32 %v652, %v688
        %v693 = vsub.f32 %v653, %v689
        %v694 = vsub.f32 %v654, %v690
        %v695 = vsub.f32 %v655, %v691
        %v696 = vsub.f32 %v692, %v647
        %v697 = vsub.f32 %v693, %v647
        %v698 = vsub.f32 %v694, %v647
        %v699 = vsub.f32 %v695, %v647
        %v700 = vld [vmem:[#allocation2] sm:$0xff]
        %v701 = vld [vmem:[#allocation2 + $0x8] sm:$0xff]
        %v702 = vpack.c.bf16 %v650, %v648
        %v703 = vpack.c.bf16 %v651, %v649
        %v704 = vld [vmem:[%s378] sm:$0xf]
        %v705 = vld [vmem:[%s378 + $0x4] sm:$0xf]
        %v706 = vld [vmem:[%s378 + $0x8] sm:$0xf]
        %v707 = vld [vmem:[%s378 + $0xc] sm:$0xf]
        %v708 = vld [vmem:[%s378 + $0x10] sm:$0xf]
        %v709 = vld [vmem:[%s378 + $0x14] sm:$0xf]
        %v710 = vld [vmem:[%s378 + $0x18] sm:$0xf]
        %v711 = vld [vmem:[%s378 + $0x1c] sm:$0xf]
        %v712 = vld [vmem:[%s378 + $0x20] sm:$0xf]
        %v713 = vld [vmem:[%s378 + $0x24] sm:$0xf]
        %v714 = vld [vmem:[%s378 + $0x28] sm:$0xf]
        %v715 = vld [vmem:[%s378 + $0x2c] sm:$0xf]
        %v716 = vld [vmem:[%s378 + $0x30] sm:$0xf]
        %v717 = vld [vmem:[%s378 + $0x34] sm:$0xf]
        %v718 = vld [vmem:[%s378 + $0x38] sm:$0xf]
        %v719 = vld [vmem:[%s378 + $0x3c] sm:$0xf]
        %v720 = vld [vmem:[%s378 + $0x40] sm:$0xf]
        %v721 = vld [vmem:[%s378 + $0x44] sm:$0xf]
        %v722 = vld [vmem:[%s378 + $0x48] sm:$0xf]
        %v723 = vld [vmem:[%s378 + $0x4c] sm:$0xf]
        %v724 = vld [vmem:[%s378 + $0x50] sm:$0xf]
        %v725 = vld [vmem:[%s378 + $0x54] sm:$0xf]
        %v726 = vld [vmem:[%s378 + $0x58] sm:$0xf]
        %v727 = vld [vmem:[%s378 + $0x5c] sm:$0xf]
        %v728 = vld [vmem:[%s378 + $0x60] sm:$0xf]
        %v729 = vld [vmem:[%s378 + $0x64] sm:$0xf]
        %v730 = vld [vmem:[%s378 + $0x68] sm:$0xf]
        %v731 = vld [vmem:[%s378 + $0x6c] sm:$0xf]
        %v732 = vld [vmem:[%s378 + $0x70] sm:$0xf]
        %v733 = vld [vmem:[%s378 + $0x74] sm:$0xf]
        %v734 = vld [vmem:[%s378 + $0x78] sm:$0xf]
        %v735 = vld [vmem:[%s378 + $0x7c] sm:$0xf]
        %v768 = vunpack.c.l.b16 %v704
        %v769 = vunpack.c.l.b16 %v705
        %v770 = vunpack.c.l.b16 %v706
        %v771 = vunpack.c.l.b16 %v707
        %v772 = vunpack.c.l.b16 %v708
        %v773 = vunpack.c.l.b16 %v709
        %v774 = vunpack.c.l.b16 %v710
        %v775 = vunpack.c.l.b16 %v711
        %v776 = vunpack.c.l.b16 %v712
        %v777 = vunpack.c.l.b16 %v713
        %v778 = vunpack.c.l.b16 %v714
        %v779 = vunpack.c.l.b16 %v715
        %v780 = vunpack.c.l.b16 %v716
        %v781 = vunpack.c.l.b16 %v717
        %v782 = vunpack.c.l.b16 %v718
        %v783 = vunpack.c.l.b16 %v719
        %v784 = vunpack.c.l.b16 %v720
        %v785 = vunpack.c.l.b16 %v721
        %v786 = vunpack.c.l.b16 %v722
        %v787 = vunpack.c.l.b16 %v723
        %v788 = vunpack.c.l.b16 %v724
        %v789 = vunpack.c.l.b16 %v725
        %v790 = vunpack.c.l.b16 %v726
        %v791 = vunpack.c.l.b16 %v727
        %v792 = vunpack.c.l.b16 %v728
        %v793 = vunpack.c.l.b16 %v729
        %v794 = vunpack.c.l.b16 %v730
        %v795 = vunpack.c.l.b16 %v731
        %v796 = vunpack.c.l.b16 %v732
        %v797 = vunpack.c.l.b16 %v733
        %v798 = vunpack.c.l.b16 %v734
        %v799 = vunpack.c.l.b16 %v735
        %v800 = vpack.c.b16 %v769, %v768
        %v801 = vpack.c.b16 %v771, %v770
        %v802 = vpack.c.b16 %v773, %v772
        %v803 = vpack.c.b16 %v775, %v774
        %v804 = vpack.c.b16 %v777, %v776
        %v805 = vpack.c.b16 %v779, %v778
        %v806 = vpack.c.b16 %v781, %v780
        %v807 = vpack.c.b16 %v783, %v782
        %v808 = vpack.c.b16 %v785, %v784
        %v809 = vpack.c.b16 %v787, %v786
        %v810 = vpack.c.b16 %v789, %v788
        %v811 = vpack.c.b16 %v791, %v790
        %v812 = vpack.c.b16 %v793, %v792
        %v813 = vpack.c.b16 %v795, %v794
        %v814 = vpack.c.b16 %v797, %v796
        %v815 = vpack.c.b16 %v799, %v798
        %832 = vmatprep.subr.bf16.mxu0 0
        %833 = vmatpush1.bf16.msra.mxu0 %v807
        %834 = vmatprep.subr.bf16.mxu0 0
        %835 = vmatpush1.bf16.msra.mxu0 %v806
        %836 = vmatprep.subr.bf16.mxu0 0
        %837 = vmatpush1.bf16.msra.mxu0 %v805
        %838 = vmatprep.subr.bf16.mxu0 0
        %839 = vmatpush1.bf16.msra.mxu0 %v804
        %840 = vmatprep.subr.bf16.mxu0 0
        %841 = vmatpush1.bf16.msra.mxu0 %v803
        %842 = vmatprep.subr.bf16.mxu0 0
        %843 = vmatpush1.bf16.msra.mxu0 %v802
        %844 = vmatprep.subr.bf16.mxu0 0
        %845 = vmatpush1.bf16.msra.mxu0 %v801
        %846 = vmatprep.subr.bf16.mxu0 0
        %847 = vmatpush1.bf16.msra.mxu0 %v800
        %848 = vmatprep.subr.bf16.mxu0 0
        %849 = vmatpush2.bf16.msra.mxu0 %v815
        %850 = vmatprep.subr.bf16.mxu0 0
        %851 = vmatpush2.bf16.msra.mxu0 %v814
        %852 = vmatprep.subr.bf16.mxu0 0
        %853 = vmatpush2.bf16.msra.mxu0 %v813
        %854 = vmatprep.subr.bf16.mxu0 0
        %855 = vmatpush2.bf16.msra.mxu0 %v812
        %856 = vmatprep.subr.bf16.mxu0 0
        %857 = vmatpush2.bf16.msra.mxu0 %v811
        %858 = vmatprep.subr.bf16.mxu0 0
        %859 = vmatpush2.bf16.msra.mxu0 %v810
        %860 = vmatprep.subr.bf16.mxu0 0
        %861 = vmatpush2.bf16.msra.mxu0 %v809
        %862 = vmatprep.subr.bf16.mxu0 0
        %863 = vmatpush2.bf16.msra.mxu0 %v808
        %864 = vmatprep.mubr.bf16.mxu0 %v703
        %865 = vmatmul.mubr.bf16.gmra.mxu0 %v702
        %v866 = vpop.f32.mrf.mxu0
        %v867 = vadd.f32 0.0, %v866
        %v868 = vpop.f32.mrf.mxu0
        %v869 = vpop.f32.mrf.mxu0
        %v870 = vadd.f32 0.0, %v869
        %v871 = vpop.f32.mrf.mxu0
        %872 = vdwg.mxu0
        %v873 = vadd.f32 %v700, %v867
        %v874 = vadd.f32 %v701, %v870
        %875 = vst [vmem:[#allocation2] sm:$0xff] %v873
        %876 = vst [vmem:[#allocation2 + $0x8] sm:$0xff] %v874
        %v877 = vld [vmem:[#allocation2] sm:$0xff]
        %v878 = vld [vmem:[#allocation2 + $0x8] sm:$0xff]
        %v879 = vpack.c.bf16 %v698, %v696
        %v880 = vpack.c.bf16 %v699, %v697
        %v881 = vld [vmem:[%s387] sm:$0xf]
        %v882 = vld [vmem:[%s387 + $0x4] sm:$0xf]
        %v883 = vld [vmem:[%s387 + $0x8] sm:$0xf]
        %v884 = vld [vmem:[%s387 + $0xc] sm:$0xf]
        %v885 = vld [vmem:[%s387 + $0x10] sm:$0xf]
        %v886 = vld [vmem:[%s387 + $0x14] sm:$0xf]
        %v887 = vld [vmem:[%s387 + $0x18] sm:$0xf]
        %v888 = vld [vmem:[%s387 + $0x1c] sm:$0xf]
        %v889 = vld [vmem:[%s387 + $0x20] sm:$0xf]
        %v890 = vld [vmem:[%s387 + $0x24] sm:$0xf]
        %v891 = vld [vmem:[%s387 + $0x28] sm:$0xf]
        %v892 = vld [vmem:[%s387 + $0x2c] sm:$0xf]
        %v893 = vld [vmem:[%s387 + $0x30] sm:$0xf]
        %v894 = vld [vmem:[%s387 + $0x34] sm:$0xf]
        %v895 = vld [vmem:[%s387 + $0x38] sm:$0xf]
        %v896 = vld [vmem:[%s387 + $0x3c] sm:$0xf]
        %v897 = vld [vmem:[%s387 + $0x40] sm:$0xf]
        %v898 = vld [vmem:[%s387 + $0x44] sm:$0xf]
        %v899 = vld [vmem:[%s387 + $0x48] sm:$0xf]
        %v900 = vld [vmem:[%s387 + $0x4c] sm:$0xf]
        %v901 = vld [vmem:[%s387 + $0x50] sm:$0xf]
        %v902 = vld [vmem:[%s387 + $0x54] sm:$0xf]
        %v903 = vld [vmem:[%s387 + $0x58] sm:$0xf]
        %v904 = vld [vmem:[%s387 + $0x5c] sm:$0xf]
        %v905 = vld [vmem:[%s387 + $0x60] sm:$0xf]
        %v906 = vld [vmem:[%s387 + $0x64] sm:$0xf]
        %v907 = vld [vmem:[%s387 + $0x68] sm:$0xf]
        %v908 = vld [vmem:[%s387 + $0x6c] sm:$0xf]
        %v909 = vld [vmem:[%s387 + $0x70] sm:$0xf]
        %v910 = vld [vmem:[%s387 + $0x74] sm:$0xf]
        %v911 = vld [vmem:[%s387 + $0x78] sm:$0xf]
        %v912 = vld [vmem:[%s387 + $0x7c] sm:$0xf]
        %v945 = vunpack.c.l.b16 %v881
        %v946 = vunpack.c.l.b16 %v882
        %v947 = vunpack.c.l.b16 %v883
        %v948 = vunpack.c.l.b16 %v884
        %v949 = vunpack.c.l.b16 %v885
        %v950 = vunpack.c.l.b16 %v886
        %v951 = vunpack.c.l.b16 %v887
        %v952 = vunpack.c.l.b16 %v888
        %v953 = vunpack.c.l.b16 %v889
        %v954 = vunpack.c.l.b16 %v890
        %v955 = vunpack.c.l.b16 %v891
        %v956 = vunpack.c.l.b16 %v892
        %v957 = vunpack.c.l.b16 %v893
        %v958 = vunpack.c.l.b16 %v894
        %v959 = vunpack.c.l.b16 %v895
        %v960 = vunpack.c.l.b16 %v896
        %v961 = vunpack.c.l.b16 %v897
        %v962 = vunpack.c.l.b16 %v898
        %v963 = vunpack.c.l.b16 %v899
        %v964 = vunpack.c.l.b16 %v900
        %v965 = vunpack.c.l.b16 %v901
        %v966 = vunpack.c.l.b16 %v902
        %v967 = vunpack.c.l.b16 %v903
        %v968 = vunpack.c.l.b16 %v904
        %v969 = vunpack.c.l.b16 %v905
        %v970 = vunpack.c.l.b16 %v906
        %v971 = vunpack.c.l.b16 %v907
        %v972 = vunpack.c.l.b16 %v908
        %v973 = vunpack.c.l.b16 %v909
        %v974 = vunpack.c.l.b16 %v910
        %v975 = vunpack.c.l.b16 %v911
        %v976 = vunpack.c.l.b16 %v912
        %v977 = vpack.c.b16 %v946, %v945
        %v978 = vpack.c.b16 %v948, %v947
        %v979 = vpack.c.b16 %v950, %v949
        %v980 = vpack.c.b16 %v952, %v951
        %v981 = vpack.c.b16 %v954, %v953
        %v982 = vpack.c.b16 %v956, %v955
        %v983 = vpack.c.b16 %v958, %v957
        %v984 = vpack.c.b16 %v960, %v959
        %v985 = vpack.c.b16 %v962, %v961
        %v986 = vpack.c.b16 %v964, %v963
        %v987 = vpack.c.b16 %v966, %v965
        %v988 = vpack.c.b16 %v968, %v967
        %v989 = vpack.c.b16 %v970, %v969
        %v990 = vpack.c.b16 %v972, %v971
        %v991 = vpack.c.b16 %v974, %v973
        %v992 = vpack.c.b16 %v976, %v975
        %1009 = vmatprep.subr.bf16.mxu0 0
        %1010 = vmatpush1.bf16.msra.mxu0 %v984
        %1011 = vmatprep.subr.bf16.mxu0 0
        %1012 = vmatpush1.bf16.msra.mxu0 %v983
        %1013 = vmatprep.subr.bf16.mxu0 0
        %1014 = vmatpush1.bf16.msra.mxu0 %v982
        %1015 = vmatprep.subr.bf16.mxu0 0
        %1016 = vmatpush1.bf16.msra.mxu0 %v981
        %1017 = vmatprep.subr.bf16.mxu0 0
        %1018 = vmatpush1.bf16.msra.mxu0 %v980
        %1019 = vmatprep.subr.bf16.mxu0 0
        %1020 = vmatpush1.bf16.msra.mxu0 %v979
        %1021 = vmatprep.subr.bf16.mxu0 0
        %1022 = vmatpush1.bf16.msra.mxu0 %v978
        %1023 = vmatprep.subr.bf16.mxu0 0
        %1024 = vmatpush1.bf16.msra.mxu0 %v977
        %1025 = vmatprep.subr.bf16.mxu0 0
        %1026 = vmatpush2.bf16.msra.mxu0 %v992
        %1027 = vmatprep.subr.bf16.mxu0 0
        %1028 = vmatpush2.bf16.msra.mxu0 %v991
        %1029 = vmatprep.subr.bf16.mxu0 0
        %1030 = vmatpush2.bf16.msra.mxu0 %v990
        %1031 = vmatprep.subr.bf16.mxu0 0
        %1032 = vmatpush2.bf16.msra.mxu0 %v989
        %1033 = vmatprep.subr.bf16.mxu0 0
        %1034 = vmatpush2.bf16.msra.mxu0 %v988
        %1035 = vmatprep.subr.bf16.mxu0 0
        %1036 = vmatpush2.bf16.msra.mxu0 %v987
        %1037 = vmatprep.subr.bf16.mxu0 0
        %1038 = vmatpush2.bf16.msra.mxu0 %v986
        %1039 = vmatprep.subr.bf16.mxu0 0
        %1040 = vmatpush2.bf16.msra.mxu0 %v985
        %1041 = vmatprep.mubr.bf16.mxu0 %v880
        %1042 = vmatmul.mubr.bf16.gmra.mxu0 %v879
        %v1043 = vpop.f32.mrf.mxu0
        %v1044 = vadd.f32 0.0, %v1043
        %v1045 = vpop.f32.mrf.mxu0
        %v1046 = vpop.f32.mrf.mxu0
        %v1047 = vadd.f32 0.0, %v1046
        %v1048 = vpop.f32.mrf.mxu0
        %1049 = vdwg.mxu0
        %v1050 = vadd.f32 %v877, %v1044
        %v1051 = vadd.f32 %v878, %v1047
        %1052 = vst [vmem:[#allocation2] sm:$0xff] %v1050
        %1053 = vst [vmem:[#allocation2 + $0x8] sm:$0xff] %v1051
        %p1054 = scmp.eq.s32.totalorder %s32, 1
        // Predicated region
        $region73: #{tpu_custom_call.1} parent=47 // pred_check
          %p1055 = pneg %p1054
        $region74: #{tpu_custom_call.1} parent=47 // pred_check_branch
          %1057 = sbr.rel (%p1055) target = $region76
        $region75: #{tpu_custom_call.1} parent=47 // pred_region
          %v1058 = vld [vmem:[#allocation2] sm:$0xff]
          %v1059 = vld [vmem:[#allocation2 + $0x8] sm:$0xff]
          %v1060 = vld [vmem:[%s6] sm:$0x1]
          %v1062 = vlaneseq
          %v1063 = vshrl.u32 %v1062, 7
          %v1064 = vsub.s32 0, %v1063
          %v1065 = vrot.slane %v1060, %v1064
          %v1067 = vadd.f32 %v1058, %v1065
          %v1068 = vadd.f32 %v1059, %v1065
          %1069 = vst [vmem:[#allocation13] sm:$0xff] %v1067
          %1070 = vst [vmem:[#allocation13 + $0x8] sm:$0xff] %v1068
        $region76: #{tpu_custom_call.1} parent=47 // pred_fallthru
          _
        // Predicated region
        $region77: #{tpu_custom_call.1} parent=47 // pred_check
          %p1071 = pneg %p229
        $region78: #{tpu_custom_call.1} parent=47 // pred_check_branch
          %1073 = sbr.rel (%p1071) target = $region80
        $region79: #{tpu_custom_call.1} parent=47 // pred_region
          %s1074 = smul.u32 2, %s31
          %s1076 = ssub.s32 256, 256
          %1077 = vsyncadd [#allocation5], %s1076
          %s1078 = smul.addr %s1074, 128
          %s1079 = scalar_lea.hbm %s7, %s1078
          %s1080 = sshll.u32 [#allocation13], 4
          %s1081 = int_to_ptr.vmem [resolvable:$true] %s1080
          %1086 = dma.vmem_to_hbm [thread:$0]  %s1081, 256, %s1079, [#allocation5], 128, 128, 8
        $region80: #{tpu_custom_call.1} parent=47 // pred_fallthru
          _
        // Predicated region
        $region81: #{tpu_custom_call.1} parent=47 // pred_check
          %p1087 = pneg %p229
        $region82: #{tpu_custom_call.1} parent=47 // pred_check_branch
          %1089 = sbr.rel (%p1087) target = $region84
        $region83: #{tpu_custom_call.1} parent=47 // pred_region
          %1090 = dma.done [#allocation5], 256
        $region84: #{tpu_custom_call.1} parent=47 // pred_fallthru
          _
      $region48: #{tpu_custom_call.1} parent=5 // pred_fallthru
        _
      %p1091 = scmp.le.s32.totalorder 2, %s22
      // Predicated region
      $region85: #{tpu_custom_call.1} parent=5 // pred_check
        %p1092 = pneg %p1091
      $region86: #{tpu_custom_call.1} parent=5 // pred_check_branch
        %1094 = sbr.rel (%p1092) target = $region88
      $region87: #{tpu_custom_call.1} parent=5 // pred_region
        %s1095 = ssub.s32 %s22, 2
      $region88: #{tpu_custom_call.1} parent=5 // pred_fallthru
        _
    $region6: #{tpu_custom_call.1} parent=1 // loop_footer
      %s26 = sadd.s32 1, %s22
    $region7: #{tpu_custom_call.1} parent=1 // loop_footer_branch
      %21 = sbr.rel target = $region3
    $region8: #{tpu_custom_call.1} parent=1 // loop_exit
      _
    %1096 = vsyncpa [#allocation4], 1
    %s1097 = scalar_lea.sflag [#allocation4], 1
    %1098 = vsyncpa %s1097, 1
    %1099 = vsyncpa [#allocation9], 1
    %s1100 = scalar_lea.sflag [#allocation9], 1
    %1101 = vsyncpa %s1100, 1
    %1102 = vsyncpa [#allocation12], 1
    %s1103 = scalar_lea.sflag [#allocation12], 1
    %1104 = vsyncpa %s1103, 1
    %1105 = vsyncpa [#allocation5], 1
    %s1106 = scalar_lea.sflag [#allocation5], 1
    %1107 = vsyncpa %s1106, 1
    %1108 = vsyncpa [#allocation6], 1
    %s1109 = scalar_lea.sflag [#allocation6], 1
    %1110 = vsyncpa %s1109, 1

</llo_original>
